<compile_context>
chip_gen: v6e
topology: v6e:2x2x1
jax: 0.10.0
libtpu: 0.0.40
codegen_flags: <defaults>
</compile_context>

<pallas_src>
import jax
import jax.numpy as jnp
from jax.experimental import pallas as pl
from jax.experimental.pallas import tpu as pltpu


# ----------------------------- kernel -------------------------------------- #

def cru_kernel(x_ref, w1_ref, w2_ref, wy1_ref, by1_ref, wp2_ref,
               s1_ref, s2_ref, y1_ref, y2_ref, ys_ref):
    """One (1, tile_rows, C) spatial tile of one image."""
    x = x_ref[0]                                                         # (T, C)

    # squeeze1 / squeeze2: channel-split folded into zero-padded K dimension.
    up = jnp.dot(x, w1_ref[...], preferred_element_type=jnp.float32)    # (T, up_sq)
    low = jnp.dot(x, w2_ref[...], preferred_element_type=jnp.float32)   # (T, low_sq)

    cd = wy1_ref.dtype
    # Y1 = GWC(up) + PWC1(up)  (fused into one dense matmul; bias from GWC).
    y1 = jnp.dot(up.astype(cd), wy1_ref[...],
                 preferred_element_type=jnp.float32) + by1_ref[...]     # (T, C)
    # Y2 = cat([PWC2(low), low]) via identity-augmented weight -> one matmul.
    y2 = jnp.dot(low.astype(cd), wp2_ref[...],
                 preferred_element_type=jnp.float32)                    # (T, C)

    # out = softmax(adaptive_avg_pool(out)) * out; the softmax scales were
    # hoisted to the wrapper (linear in x) and arrive as per-image (1, C) rows.
    y1o = y1 * s1_ref[0]
    y2o = y2 * s2_ref[0]

    y1_ref[0] = y1o.astype(y1_ref.dtype)
    y2_ref[0] = y2o.astype(y2_ref.dtype)
    ys_ref[0] = (y1o + y2o).astype(ys_ref.dtype)


# --------------------------- parameters ------------------------------------ #

def make_params(key, op_channel, alpha=0.5, squeeze_radio=2, group_kernel_size=1):
    """Deterministic synthetic CRU parameters, stored in x@W (Cin, Cout) form."""
    assert group_kernel_size == 1  # TODO(synk): only 1x1 GWC kernels are folded here
    up_c = int(alpha * op_channel)
    low_c = op_channel - up_c
    up_sq = up_c // squeeze_radio
    low_sq = low_c // squeeze_radio
    ks = jax.random.split(key, 6)

    w1 = jax.random.normal(ks[0], (up_c, up_sq), jnp.float32) * 0.5
    w2 = jax.random.normal(ks[1], (low_c, low_sq), jnp.float32) * 0.5

    # GWC: grouped 1x1 conv, groups=up_sq, 1 input channel per group, bias.
    # Dense equivalent: output channel o reads only input channel o // group_size.
    w_gwc = jax.random.normal(ks[2], (op_channel,), jnp.float32) * 0.5
    group_size = op_channel // up_sq
    oc = jnp.arange(op_channel)
    gwc_dense = jnp.zeros((up_sq, op_channel), jnp.float32).at[oc // group_size, oc].set(w_gwc)
    b_gwc = jax.random.normal(ks[3], (op_channel,), jnp.float32) * 0.1

    w_pwc1 = jax.random.normal(ks[4], (up_sq, op_channel), jnp.float32) * 0.5
    wp2 = jax.random.normal(ks[5], (low_sq, op_channel - low_sq), jnp.float32) * 0.5
    return dict(w1=w1, w2=w2, gwc=gwc_dense, b_gwc=b_gwc, pwc1=w_pwc1, pwc2=wp2,
                up_c=up_c, low_c=low_c)


def fold_params(raw):
    """Fold CRU weights into 5 lane-dense matmul operands for the kernel."""
    w1, w2 = raw["w1"], raw["w2"]
    up_c, low_c = raw["up_c"], raw["low_c"]
    C = up_c + low_c
    up_sq, low_sq = w1.shape[1], w2.shape[1]
    # channel split folded into zero-padded squeeze weights (full-C K dim)
    w1p = jnp.zeros((C, up_sq), jnp.float32).at[:up_c, :].set(w1)
    w2p = jnp.zeros((C, low_sq), jnp.float32).at[up_c:, :].set(w2)
    # GWC + PWC1 fused; bias comes from GWC
    wy1 = raw["gwc"] + raw["pwc1"]
    by1 = raw["b_gwc"].reshape(1, C)
    # Y2 concat folded into identity-augmented PWC2 weight
    wp2a = jnp.concatenate([raw["pwc2"], jnp.eye(low_sq, dtype=jnp.float32)], axis=1)
    return (w1p, w2p, wy1, by1, wp2a)


# ----------------------------- wrapper -------------------------------------- #

def _pick_tile_rows(hw, c, itemsize, requested=None,
                    vmem_budget_bytes=24 * 1024 * 1024):
    """Largest row tile that divides HW, is a multiple of 8 and fits the budget."""
    if requested is None:
        # 2 pipeline buffers x (1 input + 3 outputs) tiles live at once.
        limit = max(8, vmem_budget_bytes // (2 * 4 * c * itemsize))
        requested = min(2048, limit)
    t = min(int(requested), hw)
    if t >= 8:
        t = (t // 8) * 8
        while t >= 8 and hw % t != 0:
            t -= 8
    if t < 8:
        t = hw  # small / awkward HW: take the full (un-tiled) spatial extent
    return t


def cru_forward_flat(x, params, *, compute_dtype=jnp.bfloat16, tile_rows=None):
    """x: (N, HW, C) activations.  Returns (Y1, Y2, Y1+Y2), each (N, HW, C)."""
    w1p, w2p, wy1, by1, wp2a = params          # float32, pre-folded
    N, HW, C = x.shape
    itemsize = jnp.dtype(compute_dtype).itemsize
    thw = _pick_tile_rows(HW, C, itemsize, tile_rows)
    n_tiles = HW // thw
    assert thw * n_tiles == HW

    # Hoisted softmax scales (the pooled output is linear in x): O(N*C) f32 work.
    xm = jnp.mean(x.astype(jnp.float32), axis=1)              # (N, C)
    p1 = (xm @ w1p) @ wy1 + by1                                # (N, C)
    p2 = (xm @ w2p) @ wp2a                                     # (N, C)
    sm = jax.nn.softmax(jnp.concatenate([p1, p2], axis=-1), axis=-1)
    s1 = sm[:, None, :C].astype(jnp.float32)                   # (N, 1, C)
    s2 = sm[:, None, C:].astype(jnp.float32)                   # (N, 1, C)

    xc = x.astype(compute_dtype)
    w1c = w1p.astype(compute_dtype)
    w2c = w2p.astype(compute_dtype)
    wy1c = wy1.astype(compute_dtype)
    wp2c = wp2a.astype(compute_dtype)
    by1f = by1.astype(jnp.float32)

    # Explicit VMEM limit sized from the actual live footprint.
    tile_bytes = thw * C * itemsize
    weight_bytes = sum(int(w.size) * itemsize for w in (w1c, w2c, wy1c, wp2c))
    est = 2 * (1 + 3) * tile_bytes + 2 * weight_bytes + 4 * C * 4 * 4 + (1 << 20)
    try:
        vmem_cap = int(pltpu.get_tpu_info().vmem_capacity_bytes)
    except Exception:
        vmem_cap = 64 * 1024 * 1024
    vmem_limit = int(min(int(vmem_cap * 0.75), max(2 * est, 16 * 1024 * 1024)))

    def wspec(shape):
        nd = len(shape)
        return pl.BlockSpec(shape, lambda b, t, _nd=nd: (0,) * _nd)

    x_spec = pl.BlockSpec((1, thw, C), lambda b, t: (b, t, 0))
    s_spec = pl.BlockSpec((1, 1, C), lambda b, t: (b, 0, 0))

    y1, y2, ys = pl.pallas_call(
        cru_kernel,
        out_shape=tuple(jax.ShapeDtypeStruct((N, HW, C), compute_dtype)
                        for _ in range(3)),
        grid_spec=pltpu.PrefetchScalarGridSpec(
            num_scalar_prefetch=0,
            grid=(N, n_tiles),
            in_specs=[
                x_spec,
                wspec(w1c.shape), wspec(w2c.shape), wspec(wy1c.shape),
                wspec(by1f.shape), wspec(wp2c.shape),
                s_spec, s_spec,
            ],
            out_specs=[x_spec, x_spec, x_spec],
        ),
        compiler_params=pltpu.CompilerParams(
            dimension_semantics=("parallel", "parallel"),
            vmem_limit_bytes=vmem_limit),
    )(xc, w1c, w2c, wy1c, by1f, wp2c, s1, s2)
    return y1, y2, ys


def cru_forward_nchw(x_nchw, params, **kw):
    # Convenience wrapper for the PyTorch-style NCHW interface.  Production
    # callers should stay in (N, HW, C) layout (cru_forward_flat) to avoid the
    # extra NCHW<->NHWC transpose HBM traffic.
    N, C, H, W = x_nchw.shape
    x = jnp.transpose(x_nchw, (0, 2, 3, 1)).reshape(N, H * W, C)
    y1, y2, ys = cru_forward_flat(x, params, **kw)
    back = lambda y: jnp.transpose(y.reshape(N, H, W, C), (0, 3, 1, 2))
    return back(y1), back(y2), back(ys)


# ---------------------------- reference ------------------------------------- #

def cru_reference(x_nchw, raw):
    """Pure-JAX f32 reference mirroring the PyTorch forward."""
    N, C, H, W = x_nchw.shape
    up_c = raw["up_c"]
    x = jnp.transpose(x_nchw, (0, 2, 3, 1))                     # NHWC
    up = x[..., :up_c] @ raw["w1"]
    low = x[..., up_c:] @ raw["w2"]
    y1 = (up @ raw["gwc"] + raw["b_gwc"]) + up @ raw["pwc1"]
    y2 = jnp.concatenate([low @ raw["pwc2"], low], axis=-1)
    out = jnp.concatenate([y1, y2], axis=-1)                    # (N,H,W,2C)
    pooled = jnp.mean(out, axis=(1, 2), keepdims=True)          # adaptive avg pool
    out = jax.nn.softmax(pooled, axis=-1) * out
    y1o, y2o = out[..., :C], out[..., C:]
    back = lambda y: jnp.transpose(y, (0, 3, 1, 2))
    return back(y1o), back(y2o), back(y1o + y2o)


def _max_rel_err(a, b):
    a = jnp.asarray(a, jnp.float32)
    b = jnp.asarray(b, jnp.float32)
    return float(jnp.max(jnp.abs(a - b)) / (jnp.max(jnp.abs(b)) + 1e-6))


if __name__ == "__main__":
    key = jax.random.PRNGKey(0)
    kx, kp = jax.random.split(key)

    N, C, H, W = 2, 4, 16, 16                   # op_channel = 4
    x = jax.random.normal(kx, (N, C, H, W), jnp.float32)
    raw = make_params(kp, op_channel=C)
    params = fold_params(raw)

    refs = cru_reference(x, raw)

    # float32 path with an explicit small spatial tile (exercises the HW grid).
    outs_f32 = cru_forward_nchw(x, params, compute_dtype=jnp.float32, tile_rows=64)
    jax.block_until_ready(outs_f32)
    for o, r in zip(outs_f32, refs):
        err = _max_rel_err(o, r)
        # Tolerance accounts for the hoisted (mathematically equivalent) pooled
        # softmax path and TPU default matmul precision.
        assert err < 2e-2, f"f32 path mismatch: rel err {err}"

    # bfloat16 activation path (default), auto tile size.
    outs_bf16 = cru_forward_nchw(x, params)
    jax.block_until_ready(outs_bf16)
    for o, r in zip(outs_bf16, refs):
        err = _max_rel_err(o, r)
        assert err < 5e-2, f"bf16 path mismatch: rel err {err}"

    print("KERNEL_OK")
</pallas_src>

<mosaic_0001>
module attributes {stable_mosaic.version = 11 : i64} {
  func.func @cru_kernel(%arg0: i32, %arg1: i32, %arg2: memref<1x64x4xf32, #tpu.memory_space<vmem>>, %arg3: memref<4x1xf32, #tpu.memory_space<vmem>>, %arg4: memref<4x1xf32, #tpu.memory_space<vmem>>, %arg5: memref<1x4xf32, #tpu.memory_space<vmem>>, %arg6: memref<1x4xf32, #tpu.memory_space<vmem>>, %arg7: memref<1x4xf32, #tpu.memory_space<vmem>>, %arg8: memref<1x1x4xf32, #tpu.memory_space<vmem>>, %arg9: memref<1x1x4xf32, #tpu.memory_space<vmem>>, %arg10: memref<1x64x4xf32, #tpu.memory_space<vmem>>, %arg11: memref<1x64x4xf32, #tpu.memory_space<vmem>>, %arg12: memref<1x64x4xf32, #tpu.memory_space<vmem>>) attributes {dimension_semantics = [#tpu.dimension_semantics<parallel>, #tpu.dimension_semantics<parallel>], iteration_bounds = array<i64: 2, 4>, scalar_prefetch = 0 : i64, scratch_operands = 0 : i64, tpu.core_type = #tpu.core_type<tc>, window_params = [{transform_indices = @transform_0, window_bounds = array<i64: 1, 64, 4>}, {pipeline_mode = #tpu.pipeline_mode<synchronous>, transform_indices = @transform_1, window_bounds = array<i64: 4, 1>}, {pipeline_mode = #tpu.pipeline_mode<synchronous>, transform_indices = @transform_2, window_bounds = array<i64: 4, 1>}, {pipeline_mode = #tpu.pipeline_mode<synchronous>, transform_indices = @transform_3, window_bounds = array<i64: 1, 4>}, {pipeline_mode = #tpu.pipeline_mode<synchronous>, transform_indices = @transform_4, window_bounds = array<i64: 1, 4>}, {pipeline_mode = #tpu.pipeline_mode<synchronous>, transform_indices = @transform_5, window_bounds = array<i64: 1, 4>}, {transform_indices = @transform_6, window_bounds = array<i64: 1, 1, 4>}, {transform_indices = @transform_7, window_bounds = array<i64: 1, 1, 4>}, {transform_indices = @transform_8, window_bounds = array<i64: 1, 64, 4>}, {transform_indices = @transform_9, window_bounds = array<i64: 1, 64, 4>}, {transform_indices = @transform_10, window_bounds = array<i64: 1, 64, 4>}]} {
    %c0 = arith.constant 0 : index
    %c0_0 = arith.constant 0 : index
    %c0_1 = arith.constant 0 : index
    %0 = vector.load %arg2[%c0, %c0_0, %c0_1] : memref<1x64x4xf32, #tpu.memory_space<vmem>>, vector<1x64x4xf32>
    %1 = vector.shape_cast %0 : vector<1x64x4xf32> to vector<64x4xf32>
    %c0_2 = arith.constant 0 : index
    %c0_3 = arith.constant 0 : index
    %2 = vector.load %arg3[%c0_2, %c0_3] : memref<4x1xf32, #tpu.memory_space<vmem>>, vector<4x1xf32>
    %cst = arith.constant dense<0.000000e+00> : vector<64x1xf32>
    %3 = tpu.matmul %1, %2, %cst {dimension_numbers = #tpu.dot_dimension_numbers<[1], [0], [0], [1], [0, 0, 1, 1], [], []>} : vector<64x4xf32>, vector<4x1xf32>, vector<64x1xf32> -> vector<64x1xf32>
    %c0_4 = arith.constant 0 : index
    %c0_5 = arith.constant 0 : index
    %4 = vector.load %arg4[%c0_4, %c0_5] : memref<4x1xf32, #tpu.memory_space<vmem>>, vector<4x1xf32>
    %cst_6 = arith.constant dense<0.000000e+00> : vector<64x1xf32>
    %5 = tpu.matmul %1, %4, %cst_6 {dimension_numbers = #tpu.dot_dimension_numbers<[1], [0], [0], [1], [0, 0, 1, 1], [], []>} : vector<64x4xf32>, vector<4x1xf32>, vector<64x1xf32> -> vector<64x1xf32>
    %c0_7 = arith.constant 0 : index
    %c0_8 = arith.constant 0 : index
    %6 = vector.load %arg5[%c0_7, %c0_8] : memref<1x4xf32, #tpu.memory_space<vmem>>, vector<1x4xf32>
    %cst_9 = arith.constant dense<0.000000e+00> : vector<64x4xf32>
    %7 = tpu.matmul %3, %6, %cst_9 {dimension_numbers = #tpu.dot_dimension_numbers<[1], [0], [0], [1], [0, 0, 1, 1], [], []>} : vector<64x1xf32>, vector<1x4xf32>, vector<64x4xf32> -> vector<64x4xf32>
    %c0_10 = arith.constant 0 : index
    %c0_11 = arith.constant 0 : index
    %8 = vector.load %arg6[%c0_10, %c0_11] : memref<1x4xf32, #tpu.memory_space<vmem>>, vector<1x4xf32>
    %9 = vector.broadcast %8 : vector<1x4xf32> to vector<64x4xf32>
    %10 = arith.addf %7, %9 : vector<64x4xf32>
    %c0_12 = arith.constant 0 : index
    %c0_13 = arith.constant 0 : index
    %11 = vector.load %arg7[%c0_12, %c0_13] : memref<1x4xf32, #tpu.memory_space<vmem>>, vector<1x4xf32>
    %cst_14 = arith.constant dense<0.000000e+00> : vector<64x4xf32>
    %12 = tpu.matmul %5, %11, %cst_14 {dimension_numbers = #tpu.dot_dimension_numbers<[1], [0], [0], [1], [0, 0, 1, 1], [], []>} : vector<64x1xf32>, vector<1x4xf32>, vector<64x4xf32> -> vector<64x4xf32>
    %c0_15 = arith.constant 0 : index
    %c0_16 = arith.constant 0 : index
    %c0_17 = arith.constant 0 : index
    %13 = vector.load %arg8[%c0_15, %c0_16, %c0_17] : memref<1x1x4xf32, #tpu.memory_space<vmem>>, vector<1x1x4xf32>
    %14 = vector.shape_cast %13 : vector<1x1x4xf32> to vector<1x4xf32>
    %15 = vector.broadcast %14 : vector<1x4xf32> to vector<64x4xf32>
    %16 = arith.mulf %10, %15 : vector<64x4xf32>
    %c0_18 = arith.constant 0 : index
    %c0_19 = arith.constant 0 : index
    %c0_20 = arith.constant 0 : index
    %17 = vector.load %arg9[%c0_18, %c0_19, %c0_20] : memref<1x1x4xf32, #tpu.memory_space<vmem>>, vector<1x1x4xf32>
    %18 = vector.shape_cast %17 : vector<1x1x4xf32> to vector<1x4xf32>
    %19 = vector.broadcast %18 : vector<1x4xf32> to vector<64x4xf32>
    %20 = arith.mulf %12, %19 : vector<64x4xf32>
    %c0_21 = arith.constant 0 : index
    %c0_22 = arith.constant 0 : index
    %c0_23 = arith.constant 0 : index
    %21 = vector.load %arg10[%c0_21, %c0_22, %c0_23] : memref<1x64x4xf32, #tpu.memory_space<vmem>>, vector<1x64x4xf32>
    %22 = vector.shape_cast %21 : vector<1x64x4xf32> to vector<64x4xf32>
    %23 = vector.shape_cast %16 : vector<64x4xf32> to vector<1x64x4xf32>
    tpu.vector_store %arg10[%c0_21, %c0_22, %c0_23], %23 {strides = array<i32>} : memref<1x64x4xf32, #tpu.memory_space<vmem>>, vector<1x64x4xf32>,
    %c0_24 = arith.constant 0 : index
    %c0_25 = arith.constant 0 : index
    %c0_26 = arith.constant 0 : index
    %24 = vector.load %arg11[%c0_24, %c0_25, %c0_26] : memref<1x64x4xf32, #tpu.memory_space<vmem>>, vector<1x64x4xf32>
    %25 = vector.shape_cast %24 : vector<1x64x4xf32> to vector<64x4xf32>
    %26 = vector.shape_cast %20 : vector<64x4xf32> to vector<1x64x4xf32>
    tpu.vector_store %arg11[%c0_24, %c0_25, %c0_26], %26 {strides = array<i32>} : memref<1x64x4xf32, #tpu.memory_space<vmem>>, vector<1x64x4xf32>,
    %27 = arith.addf %16, %20 : vector<64x4xf32>
    %c0_27 = arith.constant 0 : index
    %c0_28 = arith.constant 0 : index
    %c0_29 = arith.constant 0 : index
    %28 = vector.load %arg12[%c0_27, %c0_28, %c0_29] : memref<1x64x4xf32, #tpu.memory_space<vmem>>, vector<1x64x4xf32>
    %29 = vector.shape_cast %28 : vector<1x64x4xf32> to vector<64x4xf32>
    %30 = vector.shape_cast %27 : vector<64x4xf32> to vector<1x64x4xf32>
    tpu.vector_store %arg12[%c0_27, %c0_28, %c0_29], %30 {strides = array<i32>} : memref<1x64x4xf32, #tpu.memory_space<vmem>>, vector<1x64x4xf32>,
    return
  }
  func.func @transform_0(%arg0: i32, %arg1: i32) -> (i32, i32, i32) {
    %c0_i32 = arith.constant 0 : i32
    %c0_i32_0 = arith.constant 0 : i32
    return %arg0, %arg1, %c0_i32 : i32, i32, i32
  }
  func.func @transform_1(%arg0: i32, %arg1: i32) -> (i32, i32) {
    %c0_i32 = arith.constant 0 : i32
    %c0_i32_0 = arith.constant 0 : i32
    %c0_i32_1 = arith.constant 0 : i32
    return %c0_i32, %c0_i32_0 : i32, i32
  }
  func.func @transform_2(%arg0: i32, %arg1: i32) -> (i32, i32) {
    %c0_i32 = arith.constant 0 : i32
    %c0_i32_0 = arith.constant 0 : i32
    %c0_i32_1 = arith.constant 0 : i32
    return %c0_i32, %c0_i32_0 : i32, i32
  }
  func.func @transform_3(%arg0: i32, %arg1: i32) -> (i32, i32) {
    %c0_i32 = arith.constant 0 : i32
    %c0_i32_0 = arith.constant 0 : i32
    %c0_i32_1 = arith.constant 0 : i32
    return %c0_i32, %c0_i32_0 : i32, i32
  }
  func.func @transform_4(%arg0: i32, %arg1: i32) -> (i32, i32) {
    %c0_i32 = arith.constant 0 : i32
    %c0_i32_0 = arith.constant 0 : i32
    %c0_i32_1 = arith.constant 0 : i32
    return %c0_i32, %c0_i32_0 : i32, i32
  }
  func.func @transform_5(%arg0: i32, %arg1: i32) -> (i32, i32) {
    %c0_i32 = arith.constant 0 : i32
    %c0_i32_0 = arith.constant 0 : i32
    %c0_i32_1 = arith.constant 0 : i32
    return %c0_i32, %c0_i32_0 : i32, i32
  }
  func.func @transform_6(%arg0: i32, %arg1: i32) -> (i32, i32, i32) {
    %c0_i32 = arith.constant 0 : i32
    %c0_i32_0 = arith.constant 0 : i32
    %c0_i32_1 = arith.constant 0 : i32
    return %arg0, %c0_i32, %c0_i32_0 : i32, i32, i32
  }
  func.func @transform_7(%arg0: i32, %arg1: i32) -> (i32, i32, i32) {
    %c0_i32 = arith.constant 0 : i32
    %c0_i32_0 = arith.constant 0 : i32
    %c0_i32_1 = arith.constant 0 : i32
    return %arg0, %c0_i32, %c0_i32_0 : i32, i32, i32
  }
  func.func @transform_8(%arg0: i32, %arg1: i32) -> (i32, i32, i32) {
    %c0_i32 = arith.constant 0 : i32
    %c0_i32_0 = arith.constant 0 : i32
    return %arg0, %arg1, %c0_i32 : i32, i32, i32
  }
  func.func @transform_9(%arg0: i32, %arg1: i32) -> (i32, i32, i32) {
    %c0_i32 = arith.constant 0 : i32
    %c0_i32_0 = arith.constant 0 : i32
    return %arg0, %arg1, %c0_i32 : i32, i32, i32
  }
  func.func @transform_10(%arg0: i32, %arg1: i32) -> (i32, i32, i32) {
    %c0_i32 = arith.constant 0 : i32
    %c0_i32_0 = arith.constant 0 : i32
    return %arg0, %arg1, %c0_i32 : i32, i32, i32
  }
}

</mosaic_0001>

<llo_original>
// kernel: tpu_custom_call.1
$region0: #{tpu_custom_call.1}
  #allocation0 [shape = 'u32[]', space=smem, size = 0x4, offset = 0x4, fixed_abs, tag = 'smem constant byte address 0x4 - core index']
  #allocation1 [shape = 'u32[144,128]{1,0:T(1,128)}', space=vmem, size = 0x12000, scoped, tag = 'internal scratch']
  %s0 = inlined_call_operand.vmem [shape: f32[2,256,4], index: 0, kind: input, shape index: {}]
  %s1 = inlined_call_operand.vmem [shape: f32[4,1], index: 1, kind: input, shape index: {}]
  %s2 = inlined_call_operand.vmem [shape: f32[4,1], index: 2, kind: input, shape index: {}]
  %s3 = inlined_call_operand.vmem [shape: f32[1,4], index: 3, kind: input, shape index: {}]
  %s4 = inlined_call_operand.vmem [shape: f32[1,4], index: 4, kind: input, shape index: {}]
  %s5 = inlined_call_operand.vmem [shape: f32[1,4], index: 5, kind: input, shape index: {}]
  %s6 = inlined_call_operand.vmem [shape: f32[2,1,4], index: 6, kind: input, shape index: {}]
  %s7 = inlined_call_operand.vmem [shape: f32[2,1,4], index: 7, kind: input, shape index: {}]
  %s8 = inlined_call_operand.vmem [shape: f32[2,256,4], index: 8, kind: output, shape index: {0}]
  %s9 = inlined_call_operand.vmem [shape: f32[2,256,4], index: 9, kind: output, shape index: {1}]
  %s10 = inlined_call_operand.vmem [shape: f32[2,256,4], index: 10, kind: output, shape index: {2}]
  %11 = xla_tuple %s8, %s9, %s10
  %s12 = sld [smem:[#allocation0]]
  $region81: #{tpu_custom_call.1} parent=0
    _
  %s14 = ssub.s32 1, %s12
  %s15 = scalar_select 0, %s14, %s12
  loop: start=0, step=1, limit=10
  $region2: #{tpu_custom_call.1} parent=0 // loop_pre_header
    _
  $region3: #{tpu_custom_call.1} parent=0 // loop_header
    %s17 = sphi 0, %s21
    %p18 = scmp.ge.s32.totalorder %s17, 10
    %s24 = sphi 0, %s36
    %s25 = sphi 0, %s32
    %s26 = sphi 0, %s24
    %s27 = sphi 0, %s25
    %s28 = sphi 0, %s26
    %s29 = sphi 0, %s27
    %s41 = sphi 0, %s43
    %s44 = sphi 0, %s41
    %s45 = sphi 0, %s44
    %s61 = sphi 0, %s45
    %s65 = sphi 0, %s65
    %s67 = sphi 0, %s65
    %s68 = sphi 0, %s67
    %s82 = sphi 0, %s68
    %s86 = sphi 0, %s86
    %s88 = sphi 0, %s86
    %s89 = sphi 0, %s88
    %s103 = sphi 0, %s89
    %s107 = sphi 0, %s107
    %s109 = sphi 0, %s107
    %s110 = sphi 0, %s109
    %s124 = sphi 0, %s110
    %s128 = sphi 0, %s128
    %s130 = sphi 0, %s128
    %s131 = sphi 0, %s130
    %s145 = sphi 0, %s131
    %s149 = sphi 0, %s149
    %s151 = sphi 0, %s149
    %s152 = sphi 0, %s151
    %s166 = sphi 0, %s152
    %s172 = sphi 0, %s174
    %s175 = sphi 0, %s172
    %s176 = sphi 0, %s175
    %s192 = sphi 0, %s176
    %s198 = sphi 0, %s200
    %s201 = sphi 0, %s198
    %s202 = sphi 0, %s201
    %s218 = sphi 0, %s202
    %s226 = sphi 0, %s228
    %s229 = sphi 0, %s226
    %s230 = sphi 0, %s229
    %s246 = sphi 0, %s230
    %s254 = sphi 0, %s256
    %s257 = sphi 0, %s254
    %s258 = sphi 0, %s257
    %s274 = sphi 0, %s258
    %s282 = sphi 0, %s284
    %s285 = sphi 0, %s282
    %s286 = sphi 0, %s285
    %s302 = sphi 0, %s286
  $region4: #{tpu_custom_call.1} parent=0 // loop_header_branch
    %20 = sbr.rel (%p18) target = $region8
  $region5: #{tpu_custom_call.1} parent=0 // loop_body
    %s22 = ssub.s32 %s17, 1
    %s23 = ssub.s32 %s17, 2
    %s30 = sadd.s32 1, %s25
    %p31 = scmp.ge.s32.totalorder %s30, 4
    %s32 = scalar_select %p31, 0, %s30
    %s33 = sadd.s32 1, %s24
    %s34 = scalar_select %p31, %s33, %s24
    %p35 = scmp.ge.s32.totalorder %s34, 2
    %s36 = scalar_select %p35, 0, %s34
    %s37 = ssub.s32 %s24, %s36
    %s38 = ssub.s32 %s25, %s32
    %s39 = sor.u32 %s37, %s38
    %p40 = scmp.eq.s32.totalorder %s39, 0
    %s42 = sadd.s32 %s41, 1
    %s43 = scalar_select %p40, %s41, %s42
    %p46 = pneg %p40
    %p47 = scmp.eq.s32.totalorder %s17, 7
    %p48 = por %p46, %p47
    %p49 = scmp.ne.s32.totalorder %s41, %s44
    %p50 = scmp.eq.s32.totalorder %s17, 0
    %p51 = por %p49, %p50
    %p52 = scmp.ne.s32.totalorder %s41, %s44
    %p53 = scmp.eq.s32.totalorder %s22, 7
    %p54 = por %p52, %p53
    %p55 = scmp.ne.s32.totalorder %s44, %s45
    %p56 = scmp.eq.s32.totalorder %s22, 0
    %p57 = por %p55, %p56
    %p58 = scmp.ne.s32.totalorder %s44, %s45
    %p59 = scmp.eq.s32.totalorder %s23, 7
    %p60 = por %p58, %p59
    %p62 = scmp.ne.s32.totalorder %s45, %s61
    %p63 = scmp.eq.s32.totalorder %s23, 0
    %p64 = por %p62, %p63
    %s66 = sadd.s32 %s65, 1
    %p69 = scmp.eq.s32.totalorder %s17, 7
    %p70 = scmp.ne.s32.totalorder %s65, %s67
    %p71 = scmp.eq.s32.totalorder %s17, 0
    %p72 = por %p70, %p71
    %p73 = scmp.ne.s32.totalorder %s65, %s67
    %p74 = scmp.eq.s32.totalorder %s22, 7
    %p75 = por %p73, %p74
    %p76 = scmp.ne.s32.totalorder %s67, %s68
    %p77 = scmp.eq.s32.totalorder %s22, 0
    %p78 = por %p76, %p77
    %p79 = scmp.ne.s32.totalorder %s67, %s68
    %p80 = scmp.eq.s32.totalorder %s23, 7
    %p81 = por %p79, %p80
    %p83 = scmp.ne.s32.totalorder %s68, %s82
    %p84 = scmp.eq.s32.totalorder %s23, 0
    %p85 = por %p83, %p84
    %s87 = sadd.s32 %s86, 1
    %p90 = scmp.eq.s32.totalorder %s17, 7
    %p91 = scmp.ne.s32.totalorder %s86, %s88
    %p92 = scmp.eq.s32.totalorder %s17, 0
    %p93 = por %p91, %p92
    %p94 = scmp.ne.s32.totalorder %s86, %s88
    %p95 = scmp.eq.s32.totalorder %s22, 7
    %p96 = por %p94, %p95
    %p97 = scmp.ne.s32.totalorder %s88, %s89
    %p98 = scmp.eq.s32.totalorder %s22, 0
    %p99 = por %p97, %p98
    %p100 = scmp.ne.s32.totalorder %s88, %s89
    %p101 = scmp.eq.s32.totalorder %s23, 7
    %p102 = por %p100, %p101
    %p104 = scmp.ne.s32.totalorder %s89, %s103
    %p105 = scmp.eq.s32.totalorder %s23, 0
    %p106 = por %p104, %p105
    %s108 = sadd.s32 %s107, 1
    %p111 = scmp.eq.s32.totalorder %s17, 7
    %p112 = scmp.ne.s32.totalorder %s107, %s109
    %p113 = scmp.eq.s32.totalorder %s17, 0
    %p114 = por %p112, %p113
    %p115 = scmp.ne.s32.totalorder %s107, %s109
    %p116 = scmp.eq.s32.totalorder %s22, 7
    %p117 = por %p115, %p116
    %p118 = scmp.ne.s32.totalorder %s109, %s110
    %p119 = scmp.eq.s32.totalorder %s22, 0
    %p120 = por %p118, %p119
    %p121 = scmp.ne.s32.totalorder %s109, %s110
    %p122 = scmp.eq.s32.totalorder %s23, 7
    %p123 = por %p121, %p122
    %p125 = scmp.ne.s32.totalorder %s110, %s124
    %p126 = scmp.eq.s32.totalorder %s23, 0
    %p127 = por %p125, %p126
    %s129 = sadd.s32 %s128, 1
    %p132 = scmp.eq.s32.totalorder %s17, 7
    %p133 = scmp.ne.s32.totalorder %s128, %s130
    %p134 = scmp.eq.s32.totalorder %s17, 0
    %p135 = por %p133, %p134
    %p136 = scmp.ne.s32.totalorder %s128, %s130
    %p137 = scmp.eq.s32.totalorder %s22, 7
    %p138 = por %p136, %p137
    %p139 = scmp.ne.s32.totalorder %s130, %s131
    %p140 = scmp.eq.s32.totalorder %s22, 0
    %p141 = por %p139, %p140
    %p142 = scmp.ne.s32.totalorder %s130, %s131
    %p143 = scmp.eq.s32.totalorder %s23, 7
    %p144 = por %p142, %p143
    %p146 = scmp.ne.s32.totalorder %s131, %s145
    %p147 = scmp.eq.s32.totalorder %s23, 0
    %p148 = por %p146, %p147
    %s150 = sadd.s32 %s149, 1
    %p153 = scmp.eq.s32.totalorder %s17, 7
    %p154 = scmp.ne.s32.totalorder %s149, %s151
    %p155 = scmp.eq.s32.totalorder %s17, 0
    %p156 = por %p154, %p155
    %p157 = scmp.ne.s32.totalorder %s149, %s151
    %p158 = scmp.eq.s32.totalorder %s22, 7
    %p159 = por %p157, %p158
    %p160 = scmp.ne.s32.totalorder %s151, %s152
    %p161 = scmp.eq.s32.totalorder %s22, 0
    %p162 = por %p160, %p161
    %p163 = scmp.ne.s32.totalorder %s151, %s152
    %p164 = scmp.eq.s32.totalorder %s23, 7
    %p165 = por %p163, %p164
    %p167 = scmp.ne.s32.totalorder %s152, %s166
    %p168 = scmp.eq.s32.totalorder %s23, 0
    %p169 = por %p167, %p168
    %s170 = ssub.s32 %s24, %s36
    %p171 = scmp.eq.s32.totalorder %s170, 0
    %s173 = sadd.s32 %s172, 1
    %s174 = scalar_select %p171, %s172, %s173
    %p177 = pneg %p171
    %p178 = scmp.eq.s32.totalorder %s17, 7
    %p179 = por %p177, %p178
    %p180 = scmp.ne.s32.totalorder %s172, %s175
    %p181 = scmp.eq.s32.totalorder %s17, 0
    %p182 = por %p180, %p181
    %p183 = scmp.ne.s32.totalorder %s172, %s175
    %p184 = scmp.eq.s32.totalorder %s22, 7
    %p185 = por %p183, %p184
    %p186 = scmp.ne.s32.totalorder %s175, %s176
    %p187 = scmp.eq.s32.totalorder %s22, 0
    %p188 = por %p186, %p187
    %p189 = scmp.ne.s32.totalorder %s175, %s176
    %p190 = scmp.eq.s32.totalorder %s23, 7
    %p191 = por %p189, %p190
    %p193 = scmp.ne.s32.totalorder %s176, %s192
    %p194 = scmp.eq.s32.totalorder %s23, 0
    %p195 = por %p193, %p194
    %s196 = ssub.s32 %s24, %s36
    %p197 = scmp.eq.s32.totalorder %s196, 0
    %s199 = sadd.s32 %s198, 1
    %s200 = scalar_select %p197, %s198, %s199
    %p203 = pneg %p197
    %p204 = scmp.eq.s32.totalorder %s17, 7
    %p205 = por %p203, %p204
    %p206 = scmp.ne.s32.totalorder %s198, %s201
    %p207 = scmp.eq.s32.totalorder %s17, 0
    %p208 = por %p206, %p207
    %p209 = scmp.ne.s32.totalorder %s198, %s201
    %p210 = scmp.eq.s32.totalorder %s22, 7
    %p211 = por %p209, %p210
    %p212 = scmp.ne.s32.totalorder %s201, %s202
    %p213 = scmp.eq.s32.totalorder %s22, 0
    %p214 = por %p212, %p213
    %p215 = scmp.ne.s32.totalorder %s201, %s202
    %p216 = scmp.eq.s32.totalorder %s23, 7
    %p217 = por %p215, %p216
    %p219 = scmp.ne.s32.totalorder %s202, %s218
    %p220 = scmp.eq.s32.totalorder %s23, 0
    %p221 = por %p219, %p220
    %s222 = ssub.s32 %s24, %s36
    %s223 = ssub.s32 %s25, %s32
    %s224 = sor.u32 %s222, %s223
    %p225 = scmp.eq.s32.totalorder %s224, 0
    %s227 = sadd.s32 %s226, 1
    %s228 = scalar_select %p225, %s226, %s227
    %p231 = pneg %p225
    %p232 = scmp.eq.s32.totalorder %s17, 7
    %p233 = por %p231, %p232
    %p234 = scmp.ne.s32.totalorder %s226, %s229
    %p235 = scmp.eq.s32.totalorder %s17, 0
    %p236 = por %p234, %p235
    %p237 = scmp.ne.s32.totalorder %s226, %s229
    %p238 = scmp.eq.s32.totalorder %s22, 7
    %p239 = por %p237, %p238
    %p240 = scmp.ne.s32.totalorder %s229, %s230
    %p241 = scmp.eq.s32.totalorder %s22, 0
    %p242 = por %p240, %p241
    %p243 = scmp.ne.s32.totalorder %s229, %s230
    %p244 = scmp.eq.s32.totalorder %s23, 7
    %p245 = por %p243, %p244
    %p247 = scmp.ne.s32.totalorder %s230, %s246
    %p248 = scmp.eq.s32.totalorder %s23, 0
    %p249 = por %p247, %p248
    %s250 = ssub.s32 %s24, %s36
    %s251 = ssub.s32 %s25, %s32
    %s252 = sor.u32 %s250, %s251
    %p253 = scmp.eq.s32.totalorder %s252, 0
    %s255 = sadd.s32 %s254, 1
    %s256 = scalar_select %p253, %s254, %s255
    %p259 = pneg %p253
    %p260 = scmp.eq.s32.totalorder %s17, 7
    %p261 = por %p259, %p260
    %p262 = scmp.ne.s32.totalorder %s254, %s257
    %p263 = scmp.eq.s32.totalorder %s17, 0
    %p264 = por %p262, %p263
    %p265 = scmp.ne.s32.totalorder %s254, %s257
    %p266 = scmp.eq.s32.totalorder %s22, 7
    %p267 = por %p265, %p266
    %p268 = scmp.ne.s32.totalorder %s257, %s258
    %p269 = scmp.eq.s32.totalorder %s22, 0
    %p270 = por %p268, %p269
    %p271 = scmp.ne.s32.totalorder %s257, %s258
    %p272 = scmp.eq.s32.totalorder %s23, 7
    %p273 = por %p271, %p272
    %p275 = scmp.ne.s32.totalorder %s258, %s274
    %p276 = scmp.eq.s32.totalorder %s23, 0
    %p277 = por %p275, %p276
    %s278 = ssub.s32 %s24, %s36
    %s279 = ssub.s32 %s25, %s32
    %s280 = sor.u32 %s278, %s279
    %p281 = scmp.eq.s32.totalorder %s280, 0
    %s283 = sadd.s32 %s282, 1
    %s284 = scalar_select %p281, %s282, %s283
    %p287 = pneg %p281
    %p288 = scmp.eq.s32.totalorder %s17, 7
    %p289 = por %p287, %p288
    %p290 = scmp.ne.s32.totalorder %s282, %s285
    %p291 = scmp.eq.s32.totalorder %s17, 0
    %p292 = por %p290, %p291
    %p293 = scmp.ne.s32.totalorder %s282, %s285
    %p294 = scmp.eq.s32.totalorder %s22, 7
    %p295 = por %p293, %p294
    %p296 = scmp.ne.s32.totalorder %s285, %s286
    %p297 = scmp.eq.s32.totalorder %s22, 0
    %p298 = por %p296, %p297
    %p299 = scmp.ne.s32.totalorder %s285, %s286
    %p300 = scmp.eq.s32.totalorder %s23, 7
    %p301 = por %p299, %p300
    %p303 = scmp.ne.s32.totalorder %s286, %s302
    %p304 = scmp.eq.s32.totalorder %s23, 0
    %p305 = por %p303, %p304
    %p306 = scmp.le.s32.totalorder 1, %s17
    %p307 = scmp.lt.s32.totalorder %s17, 9
    %p308 = pnand %p306, %p307
    %p309 = pneg %p308
    // Predicated region
    $region9: #{tpu_custom_call.1} parent=5 // pred_check
      _
    $region10: #{tpu_custom_call.1} parent=5 // pred_check_branch
      %311 = sbr.rel (%p308) target = $region12
    $region11: #{tpu_custom_call.1} parent=5 // pred_region
      %s312 = ssub.s32 %s17, 1
      // Predicated region
      $region13: #{tpu_custom_call.1} parent=11 // pred_check
        %p313 = pneg %p78
      $region14: #{tpu_custom_call.1} parent=11 // pred_check_branch
        %315 = sbr.rel (%p313) target = $region16
      $region15: #{tpu_custom_call.1} parent=11 // pred_region
        _
      $region16: #{tpu_custom_call.1} parent=11 // pred_fallthru
        _
      // Predicated region
      $region17: #{tpu_custom_call.1} parent=11 // pred_check
        %p316 = pneg %p99
      $region18: #{tpu_custom_call.1} parent=11 // pred_check_branch
        %318 = sbr.rel (%p316) target = $region20
      $region19: #{tpu_custom_call.1} parent=11 // pred_region
        _
      $region20: #{tpu_custom_call.1} parent=11 // pred_fallthru
        _
      // Predicated region
      $region21: #{tpu_custom_call.1} parent=11 // pred_check
        %p319 = pneg %p120
      $region22: #{tpu_custom_call.1} parent=11 // pred_check_branch
        %321 = sbr.rel (%p319) target = $region24
      $region23: #{tpu_custom_call.1} parent=11 // pred_region
        _
      $region24: #{tpu_custom_call.1} parent=11 // pred_fallthru
        _
      // Predicated region
      $region25: #{tpu_custom_call.1} parent=11 // pred_check
        %p322 = pneg %p141
      $region26: #{tpu_custom_call.1} parent=11 // pred_check_branch
        %324 = sbr.rel (%p322) target = $region28
      $region27: #{tpu_custom_call.1} parent=11 // pred_region
        _
      $region28: #{tpu_custom_call.1} parent=11 // pred_fallthru
        _
      // Predicated region
      $region29: #{tpu_custom_call.1} parent=11 // pred_check
        %p325 = pneg %p162
      $region30: #{tpu_custom_call.1} parent=11 // pred_check_branch
        %327 = sbr.rel (%p325) target = $region32
      $region31: #{tpu_custom_call.1} parent=11 // pred_region
        _
      $region32: #{tpu_custom_call.1} parent=11 // pred_fallthru
        _
    $region12: #{tpu_custom_call.1} parent=5 // pred_fallthru
      _
    %p328 = scmp.lt.s32.totalorder %s17, 8
    // Predicated region
    $region33: #{tpu_custom_call.1} parent=5 // pred_check
      %p329 = pneg %p328
    $region34: #{tpu_custom_call.1} parent=5 // pred_check_branch
      %331 = sbr.rel (%p329) target = $region36
    $region35: #{tpu_custom_call.1} parent=5 // pred_region
      // Predicated region
      $region37: #{tpu_custom_call.1} parent=35 // pred_check
        %p332 = pneg %p51
      $region38: #{tpu_custom_call.1} parent=35 // pred_check_branch
        %334 = sbr.rel (%p332) target = $region40
      $region39: #{tpu_custom_call.1} parent=35 // pred_region
        %s335 = smul.u32 8, %s25
        %p336 = scmp.lt.s32.totalorder %s24, 1
        %s337 = scalar_select %p336, %s24, 1
        %p338 = scmp.lt.s32.totalorder %s335, 31
        %s339 = scalar_select %p338, %s335, 31
        %s340 = smul.addr %s337, 32
        %s341 = sadd.s32 %s339, %s340
        %s342 = smul.addr %s341, 8
        %s343 = scalar_lea.vmem %s0, %s342
        %s344 = smul.u32 8, %s25
      $region40: #{tpu_custom_call.1} parent=35 // pred_fallthru
        _
      // Predicated region
      $region41: #{tpu_custom_call.1} parent=35 // pred_check
        %p345 = pneg %p182
      $region42: #{tpu_custom_call.1} parent=35 // pred_check_branch
        %347 = sbr.rel (%p345) target = $region44
      $region43: #{tpu_custom_call.1} parent=35 // pred_region
        %p348 = scmp.lt.s32.totalorder %s24, 1
        %s349 = scalar_select %p348, %s24, 1
        %s350 = scalar_lea.vmem %s6, %s349
      $region44: #{tpu_custom_call.1} parent=35 // pred_fallthru
        _
      // Predicated region
      $region45: #{tpu_custom_call.1} parent=35 // pred_check
        %p351 = pneg %p208
      $region46: #{tpu_custom_call.1} parent=35 // pred_check_branch
        %353 = sbr.rel (%p351) target = $region48
      $region47: #{tpu_custom_call.1} parent=35 // pred_region
        %p354 = scmp.lt.s32.totalorder %s24, 1
        %s355 = scalar_select %p354, %s24, 1
        %s356 = scalar_lea.vmem %s7, %s355
      $region48: #{tpu_custom_call.1} parent=35 // pred_fallthru
        _
    $region36: #{tpu_custom_call.1} parent=5 // pred_fallthru
      _
    %p357 = scmp.le.s32.totalorder 1, %s17
    %p358 = scmp.lt.s32.totalorder %s17, 9
    %p359 = pnand %p357, %p358
    %p360 = pneg %p359
    // Predicated region
    $region49: #{tpu_custom_call.1} parent=5 // pred_check
      _
    $region50: #{tpu_custom_call.1} parent=5 // pred_check_branch
      %362 = sbr.rel (%p359) target = $region52
    $region51: #{tpu_custom_call.1} parent=5 // pred_region
      %s363 = ssub.s32 %s17, 1
      %s364 = smul.u32 8, %s27
      %p365 = scmp.lt.s32.totalorder %s26, 1
      %s366 = scalar_select %p365, %s26, 1
      %p367 = scmp.lt.s32.totalorder %s364, 31
      %s368 = scalar_select %p367, %s364, 31
      %s369 = smul.addr %s366, 32
      %s370 = sadd.s32 %s368, %s369
      %s371 = smul.addr %s370, 8
      %s372 = scalar_lea.vmem %s0, %s371
      %p373 = pneg %p57
      %p374 = pneg %p54
      %p375 = pneg %p78
      %p376 = pneg %p75
      %p377 = pneg %p99
      %p378 = pneg %p96
      %p379 = pneg %p120
      %p380 = pneg %p117
      %p381 = pneg %p141
      %p382 = pneg %p138
      %p383 = pneg %p162
      %p384 = pneg %p159
      %p385 = scmp.lt.s32.totalorder %s26, 1
      %s386 = scalar_select %p385, %s26, 1
      %s387 = scalar_lea.vmem %s6, %s386
      %p388 = pneg %p188
      %p389 = pneg %p185
      %p390 = scmp.lt.s32.totalorder %s26, 1
      %s391 = scalar_select %p390, %s26, 1
      %s392 = scalar_lea.vmem %s7, %s391
      %p393 = pneg %p214
      %p394 = pneg %p211
      %p395 = pneg %p242
      %p396 = pneg %p239
      %s397 = smul.u32 8, %s27
      %p398 = scmp.lt.s32.totalorder %s26, 1
      %s399 = scalar_select %p398, %s26, 1
      %p400 = scmp.lt.s32.totalorder %s397, 31
      %s401 = scalar_select %p400, %s397, 31
      %s402 = smul.addr %s399, 32
      %s403 = sadd.s32 %s401, %s402
      %s404 = smul.addr %s403, 8
      %s405 = scalar_lea.vmem %s8, %s404
      %p406 = pneg %p270
      %p407 = pneg %p267
      %s408 = smul.u32 8, %s27
      %p409 = scmp.lt.s32.totalorder %s26, 1
      %s410 = scalar_select %p409, %s26, 1
      %p411 = scmp.lt.s32.totalorder %s408, 31
      %s412 = scalar_select %p411, %s408, 31
      %s413 = smul.addr %s410, 32
      %s414 = sadd.s32 %s412, %s413
      %s415 = smul.addr %s414, 8
      %s416 = scalar_lea.vmem %s9, %s415
      %p417 = pneg %p298
      %p418 = pneg %p295
      %s419 = smul.u32 8, %s27
      %p420 = scmp.lt.s32.totalorder %s26, 1
      %s421 = scalar_select %p420, %s26, 1
      %p422 = scmp.lt.s32.totalorder %s419, 31
      %s423 = scalar_select %p422, %s419, 31
      %s424 = smul.addr %s421, 32
      %s425 = sadd.s32 %s423, %s424
      %s426 = smul.addr %s425, 8
      %s427 = scalar_lea.vmem %s10, %s426
      %s428 = smul.u32 8, %s27
      %p429 = scmp.lt.s32.totalorder %s26, 1
      %s430 = scalar_select %p429, %s26, 1
      %p431 = scmp.lt.s32.totalorder %s428, 31
      %s432 = scalar_select %p431, %s428, 31
      %s433 = smul.addr %s430, 32
      %s434 = sadd.s32 %s432, %s433
      %s435 = smul.addr %s434, 8
      %s436 = scalar_lea.vmem %s0, %s435
      %s437 = smul.u32 8, %s27
      %p438 = scmp.lt.s32.totalorder %s26, 1
      %s439 = scalar_select %p438, %s26, 1
      %s440 = scalar_lea.vmem %s6, %s439
      %p441 = scmp.lt.s32.totalorder %s26, 1
      %s442 = scalar_select %p441, %s26, 1
      %s443 = scalar_lea.vmem %s7, %s442
      %s444 = smul.u32 8, %s27
      %p445 = scmp.lt.s32.totalorder %s26, 1
      %s446 = scalar_select %p445, %s26, 1
      %p447 = scmp.lt.s32.totalorder %s444, 31
      %s448 = scalar_select %p447, %s444, 31
      %s449 = smul.addr %s446, 32
      %s450 = sadd.s32 %s448, %s449
      %s451 = smul.addr %s450, 8
      %s452 = scalar_lea.vmem %s8, %s451
      %s453 = smul.u32 8, %s27
      %s454 = smul.u32 8, %s27
      %p455 = scmp.lt.s32.totalorder %s26, 1
      %s456 = scalar_select %p455, %s26, 1
      %p457 = scmp.lt.s32.totalorder %s454, 31
      %s458 = scalar_select %p457, %s454, 31
      %s459 = smul.addr %s456, 32
      %s460 = sadd.s32 %s458, %s459
      %s461 = smul.addr %s460, 8
      %s462 = scalar_lea.vmem %s9, %s461
      %s463 = smul.u32 8, %s27
      %s464 = smul.u32 8, %s27
      %p465 = scmp.lt.s32.totalorder %s26, 1
      %s466 = scalar_select %p465, %s26, 1
      %p467 = scmp.lt.s32.totalorder %s464, 31
      %s468 = scalar_select %p467, %s464, 31
      %s469 = smul.addr %s466, 32
      %s470 = sadd.s32 %s468, %s469
      %s471 = smul.addr %s470, 8
      %s472 = scalar_lea.vmem %s10, %s471
      %s473 = smul.u32 8, %s27
      %v474 = vld [vmem:[%s436] sm:$0xff]
      %v475 = vld [vmem:[%s436 + $0x8] sm:$0xff]
      %v476 = vld [vmem:[%s436 + $0x10] sm:$0xff]
      %v477 = vld [vmem:[%s436 + $0x18] sm:$0xff]
      %v478 = vld [vmem:[%s436 + $0x20] sm:$0xff]
      %v479 = vld [vmem:[%s436 + $0x28] sm:$0xff]
      %v480 = vld [vmem:[%s436 + $0x30] sm:$0xff]
      %v481 = vld [vmem:[%s436 + $0x38] sm:$0xff]
      %v482 = vld [vmem:[%s1] sm:$0xf]
      %vm483 = vcmask 31744
      %v485 = vsel %vm483, %v474, 0
      %v488 = vsel %vm483, %v475, 0
      %v491 = vsel %vm483, %v476, 0
      %v494 = vsel %vm483, %v477, 0
      %v497 = vsel %vm483, %v478, 0
      %v500 = vsel %vm483, %v479, 0
      %v503 = vsel %vm483, %v480, 0
      %v506 = vsel %vm483, %v481, 0
      %vm508 = vcmask 1043456
      %v510 = vsel %vm508, %v482, 0
      %512 = vmatprep.subr.mxu0 0.0
      %513 = vmatpush1.msra.mxu0 0.0
      %514 = vmatprep.subr.mxu0 0.0
      %515 = vmatpush1.msra.mxu0 0.0
      %516 = vmatprep.subr.mxu0 0.0
      %517 = vmatpush1.msra.mxu0 0.0
      %518 = vmatprep.subr.mxu0 0.0
      %519 = vmatpush1.msra.mxu0 0.0
      %520 = vmatprep.subr.mxu0 0.0
      %521 = vmatpush1.msra.mxu0 0.0
      %522 = vmatprep.subr.mxu0 0.0
      %523 = vmatpush1.msra.mxu0 0.0
      %524 = vmatprep.subr.mxu0 0.0
      %525 = vmatpush1.msra.mxu0 0.0
      %526 = vmatprep.subr.mxu0 0.0
      %527 = vmatpush1.msra.mxu0 0.0
      %528 = vmatprep.subr.mxu0 0.0
      %529 = vmatpush1.msra.mxu0 0.0
      %530 = vmatprep.subr.mxu0 0.0
      %531 = vmatpush1.msra.mxu0 0.0
      %532 = vmatprep.subr.mxu0 0.0
      %533 = vmatpush1.msra.mxu0 0.0
      %534 = vmatprep.subr.mxu0 0.0
      %535 = vmatpush1.msra.mxu0 0.0
      %536 = vmatprep.subr.mxu0 0.0
      %537 = vmatpush1.msra.mxu0 0.0
      %538 = vmatprep.subr.mxu0 0.0
      %539 = vmatpush1.msra.mxu0 0.0
      %540 = vmatprep.subr.mxu0 0.0
      %541 = vmatpush1.msra.mxu0 0.0
      %542 = vmatprep.subr.mxu0 0.0
      %543 = vmatpush1.msra.mxu0 %v510
      %544 = vmatprep.subr.mxu0 0.0
      %545 = vmatpush2.msra.mxu0 0.0
      %546 = vmatprep.subr.mxu0 0.0
      %547 = vmatpush2.msra.mxu0 0.0
      %548 = vmatprep.subr.mxu0 0.0
      %549 = vmatpush2.msra.mxu0 0.0
      %550 = vmatprep.subr.mxu0 0.0
      %551 = vmatpush2.msra.mxu0 0.0
      %552 = vmatprep.subr.mxu0 0.0
      %553 = vmatpush2.msra.mxu0 0.0
      %554 = vmatprep.subr.mxu0 0.0
      %555 = vmatpush2.msra.mxu0 0.0
      %556 = vmatprep.subr.mxu0 0.0
      %557 = vmatpush2.msra.mxu0 0.0
      %558 = vmatprep.subr.mxu0 0.0
      %559 = vmatpush2.msra.mxu0 0.0
      %560 = vmatprep.subr.mxu0 0.0
      %561 = vmatpush2.msra.mxu0 0.0
      %562 = vmatprep.subr.mxu0 0.0
      %563 = vmatpush2.msra.mxu0 0.0
      %564 = vmatprep.subr.mxu0 0.0
      %565 = vmatpush2.msra.mxu0 0.0
      %566 = vmatprep.subr.mxu0 0.0
      %567 = vmatpush2.msra.mxu0 0.0
      %568 = vmatprep.subr.mxu0 0.0
      %569 = vmatpush2.msra.mxu0 0.0
      %570 = vmatprep.subr.mxu0 0.0
      %571 = vmatpush2.msra.mxu0 0.0
      %572 = vmatprep.subr.mxu0 0.0
      %573 = vmatpush2.msra.mxu0 0.0
      %574 = vmatprep.subr.mxu0 0.0
      %575 = vmatpush2.msra.mxu0 0.0
      %576 = vmatprep.mubr.f32.mxu0 0.0
      %577 = vmatmul.mubr.f32.gmra.mxu0 %v485
      %v578 = vpop.f32.mrf.mxu0
      %v579 = vadd.f32 0.0, %v578
      %v580 = vpop.f32.mrf.mxu0
      %581 = vmatprep.mubr.f32.mxu0 0.0
      %582 = vmatmul.mubr.f32.gmra.mxu0 %v488
      %v583 = vpop.f32.mrf.mxu0
      %v584 = vadd.f32 0.0, %v583
      %v585 = vpop.f32.mrf.mxu0
      %586 = vmatprep.mubr.f32.mxu0 0.0
      %587 = vmatmul.mubr.f32.gmra.mxu0 %v491
      %v588 = vpop.f32.mrf.mxu0
      %v589 = vadd.f32 0.0, %v588
      %v590 = vpop.f32.mrf.mxu0
      %591 = vmatprep.mubr.f32.mxu0 0.0
      %592 = vmatmul.mubr.f32.gmra.mxu0 %v494
      %v593 = vpop.f32.mrf.mxu0
      %v594 = vadd.f32 0.0, %v593
      %v595 = vpop.f32.mrf.mxu0
      %596 = vmatprep.mubr.f32.mxu0 0.0
      %597 = vmatmul.mubr.f32.gmra.mxu0 %v497
      %v598 = vpop.f32.mrf.mxu0
      %v599 = vadd.f32 0.0, %v598
      %v600 = vpop.f32.mrf.mxu0
      %601 = vmatprep.mubr.f32.mxu0 0.0
      %602 = vmatmul.mubr.f32.gmra.mxu0 %v500
      %v603 = vpop.f32.mrf.mxu0
      %v604 = vadd.f32 0.0, %v603
      %v605 = vpop.f32.mrf.mxu0
      %606 = vmatprep.mubr.f32.mxu0 0.0
      %607 = vmatmul.mubr.f32.gmra.mxu0 %v503
      %v608 = vpop.f32.mrf.mxu0
      %v609 = vadd.f32 0.0, %v608
      %v610 = vpop.f32.mrf.mxu0
      %611 = vmatprep.mubr.f32.mxu0 0.0
      %612 = vmatmul.mubr.f32.gmra.mxu0 %v506
      %v613 = vpop.f32.mrf.mxu0
      %v614 = vadd.f32 0.0, %v613
      %v615 = vpop.f32.mrf.mxu0
      %616 = vdwg.mxu0
      %v617 = vld [vmem:[%s2] sm:$0xf]
      %v619 = vsel %vm508, %v617, 0
      %621 = vmatprep.subr.mxu0 0.0
      %622 = vmatpush1.msra.mxu0 0.0
      %623 = vmatprep.subr.mxu0 0.0
      %624 = vmatpush1.msra.mxu0 0.0
      %625 = vmatprep.subr.mxu0 0.0
      %626 = vmatpush1.msra.mxu0 0.0
      %627 = vmatprep.subr.mxu0 0.0
      %628 = vmatpush1.msra.mxu0 0.0
      %629 = vmatprep.subr.mxu0 0.0
      %630 = vmatpush1.msra.mxu0 0.0
      %631 = vmatprep.subr.mxu0 0.0
      %632 = vmatpush1.msra.mxu0 0.0
      %633 = vmatprep.subr.mxu0 0.0
      %634 = vmatpush1.msra.mxu0 0.0
      %635 = vmatprep.subr.mxu0 0.0
      %636 = vmatpush1.msra.mxu0 0.0
      %637 = vmatprep.subr.mxu0 0.0
      %638 = vmatpush1.msra.mxu0 0.0
      %639 = vmatprep.subr.mxu0 0.0
      %640 = vmatpush1.msra.mxu0 0.0
      %641 = vmatprep.subr.mxu0 0.0
      %642 = vmatpush1.msra.mxu0 0.0
      %643 = vmatprep.subr.mxu0 0.0
      %644 = vmatpush1.msra.mxu0 0.0
      %645 = vmatprep.subr.mxu0 0.0
      %646 = vmatpush1.msra.mxu0 0.0
      %647 = vmatprep.subr.mxu0 0.0
      %648 = vmatpush1.msra.mxu0 0.0
      %649 = vmatprep.subr.mxu0 0.0
      %650 = vmatpush1.msra.mxu0 0.0
      %651 = vmatprep.subr.mxu0 0.0
      %652 = vmatpush1.msra.mxu0 %v619
      %653 = vmatprep.subr.mxu0 0.0
      %654 = vmatpush2.msra.mxu0 0.0
      %655 = vmatprep.subr.mxu0 0.0
      %656 = vmatpush2.msra.mxu0 0.0
      %657 = vmatprep.subr.mxu0 0.0
      %658 = vmatpush2.msra.mxu0 0.0
      %659 = vmatprep.subr.mxu0 0.0
      %660 = vmatpush2.msra.mxu0 0.0
      %661 = vmatprep.subr.mxu0 0.0
      %662 = vmatpush2.msra.mxu0 0.0
      %663 = vmatprep.subr.mxu0 0.0
      %664 = vmatpush2.msra.mxu0 0.0
      %665 = vmatprep.subr.mxu0 0.0
      %666 = vmatpush2.msra.mxu0 0.0
      %667 = vmatprep.subr.mxu0 0.0
      %668 = vmatpush2.msra.mxu0 0.0
      %669 = vmatprep.subr.mxu0 0.0
      %670 = vmatpush2.msra.mxu0 0.0
      %671 = vmatprep.subr.mxu0 0.0
      %672 = vmatpush2.msra.mxu0 0.0
      %673 = vmatprep.subr.mxu0 0.0
      %674 = vmatpush2.msra.mxu0 0.0
      %675 = vmatprep.subr.mxu0 0.0
      %676 = vmatpush2.msra.mxu0 0.0
      %677 = vmatprep.subr.mxu0 0.0
      %678 = vmatpush2.msra.mxu0 0.0
      %679 = vmatprep.subr.mxu0 0.0
      %680 = vmatpush2.msra.mxu0 0.0
      %681 = vmatprep.subr.mxu0 0.0
      %682 = vmatpush2.msra.mxu0 0.0
      %683 = vmatprep.subr.mxu0 0.0
      %684 = vmatpush2.msra.mxu0 0.0
      %685 = vmatprep.mubr.f32.mxu0 0.0
      %686 = vmatmul.mubr.f32.gmra.mxu0 %v485
      %v687 = vpop.f32.mrf.mxu0
      %v688 = vadd.f32 0.0, %v687
      %v689 = vpop.f32.mrf.mxu0
      %690 = vmatprep.mubr.f32.mxu0 0.0
      %691 = vmatmul.mubr.f32.gmra.mxu0 %v488
      %v692 = vpop.f32.mrf.mxu0
      %v693 = vadd.f32 0.0, %v692
      %v694 = vpop.f32.mrf.mxu0
      %695 = vmatprep.mubr.f32.mxu0 0.0
      %696 = vmatmul.mubr.f32.gmra.mxu0 %v491
      %v697 = vpop.f32.mrf.mxu0
      %v698 = vadd.f32 0.0, %v697
      %v699 = vpop.f32.mrf.mxu0
      %700 = vmatprep.mubr.f32.mxu0 0.0
      %701 = vmatmul.mubr.f32.gmra.mxu0 %v494
      %v702 = vpop.f32.mrf.mxu0
      %v703 = vadd.f32 0.0, %v702
      %v704 = vpop.f32.mrf.mxu0
      %705 = vmatprep.mubr.f32.mxu0 0.0
      %706 = vmatmul.mubr.f32.gmra.mxu0 %v497
      %v707 = vpop.f32.mrf.mxu0
      %v708 = vadd.f32 0.0, %v707
      %v709 = vpop.f32.mrf.mxu0
      %710 = vmatprep.mubr.f32.mxu0 0.0
      %711 = vmatmul.mubr.f32.gmra.mxu0 %v500
      %v712 = vpop.f32.mrf.mxu0
      %v713 = vadd.f32 0.0, %v712
      %v714 = vpop.f32.mrf.mxu0
      %715 = vmatprep.mubr.f32.mxu0 0.0
      %716 = vmatmul.mubr.f32.gmra.mxu0 %v503
      %v717 = vpop.f32.mrf.mxu0
      %v718 = vadd.f32 0.0, %v717
      %v719 = vpop.f32.mrf.mxu0
      %720 = vmatprep.mubr.f32.mxu0 0.0
      %721 = vmatmul.mubr.f32.gmra.mxu0 %v506
      %v722 = vpop.f32.mrf.mxu0
      %v723 = vadd.f32 0.0, %v722
      %v724 = vpop.f32.mrf.mxu0
      %725 = vdwg.mxu0
      %v726 = vld [vmem:[%s3] sm:$0x1]
      %v727 = vld [vmem:[%s4] sm:$0x1]
      %v729 = vlaneseq
      %v730 = vshrl.u32 %v729, 7
      %v731 = vsub.s32 0, %v730
      %v732 = vrot.slane %v727, %v731
      %vm734 = vcmask 7168
      %v736 = vsel %vm734, %v579, 0
      %v739 = vsel %vm734, %v584, 0
      %v742 = vsel %vm734, %v589, 0
      %v745 = vsel %vm734, %v594, 0
      %v748 = vsel %vm734, %v599, 0
      %v751 = vsel %vm734, %v604, 0
      %v754 = vsel %vm734, %v609, 0
      %v757 = vsel %vm734, %v614, 0
      %vm759 = vcmask 1040384
      %v761 = vsel %vm759, %v726, 0
      %763 = vmatprep.subr.mxu0 0.0
      %764 = vmatpush1.msra.mxu0 0.0
      %765 = vmatprep.subr.mxu0 0.0
      %766 = vmatpush1.msra.mxu0 0.0
      %767 = vmatprep.subr.mxu0 0.0
      %768 = vmatpush1.msra.mxu0 0.0
      %769 = vmatprep.subr.mxu0 0.0
      %770 = vmatpush1.msra.mxu0 0.0
      %771 = vmatprep.subr.mxu0 0.0
      %772 = vmatpush1.msra.mxu0 0.0
      %773 = vmatprep.subr.mxu0 0.0
      %774 = vmatpush1.msra.mxu0 0.0
      %775 = vmatprep.subr.mxu0 0.0
      %776 = vmatpush1.msra.mxu0 0.0
      %777 = vmatprep.subr.mxu0 0.0
      %778 = vmatpush1.msra.mxu0 0.0
      %779 = vmatprep.subr.mxu0 0.0
      %780 = vmatpush1.msra.mxu0 0.0
      %781 = vmatprep.subr.mxu0 0.0
      %782 = vmatpush1.msra.mxu0 0.0
      %783 = vmatprep.subr.mxu0 0.0
      %784 = vmatpush1.msra.mxu0 0.0
      %785 = vmatprep.subr.mxu0 0.0
      %786 = vmatpush1.msra.mxu0 0.0
      %787 = vmatprep.subr.mxu0 0.0
      %788 = vmatpush1.msra.mxu0 0.0
      %789 = vmatprep.subr.mxu0 0.0
      %790 = vmatpush1.msra.mxu0 0.0
      %791 = vmatprep.subr.mxu0 0.0
      %792 = vmatpush1.msra.mxu0 0.0
      %793 = vmatprep.subr.mxu0 0.0
      %794 = vmatpush1.msra.mxu0 %v761
      %795 = vmatprep.subr.mxu0 0.0
      %796 = vmatpush2.msra.mxu0 0.0
      %797 = vmatprep.subr.mxu0 0.0
      %798 = vmatpush2.msra.mxu0 0.0
      %799 = vmatprep.subr.mxu0 0.0
      %800 = vmatpush2.msra.mxu0 0.0
      %801 = vmatprep.subr.mxu0 0.0
      %802 = vmatpush2.msra.mxu0 0.0
      %803 = vmatprep.subr.mxu0 0.0
      %804 = vmatpush2.msra.mxu0 0.0
      %805 = vmatprep.subr.mxu0 0.0
      %806 = vmatpush2.msra.mxu0 0.0
      %807 = vmatprep.subr.mxu0 0.0
      %808 = vmatpush2.msra.mxu0 0.0
      %809 = vmatprep.subr.mxu0 0.0
      %810 = vmatpush2.msra.mxu0 0.0
      %811 = vmatprep.subr.mxu0 0.0
      %812 = vmatpush2.msra.mxu0 0.0
      %813 = vmatprep.subr.mxu0 0.0
      %814 = vmatpush2.msra.mxu0 0.0
      %815 = vmatprep.subr.mxu0 0.0
      %816 = vmatpush2.msra.mxu0 0.0
      %817 = vmatprep.subr.mxu0 0.0
      %818 = vmatpush2.msra.mxu0 0.0
      %819 = vmatprep.subr.mxu0 0.0
      %820 = vmatpush2.msra.mxu0 0.0
      %821 = vmatprep.subr.mxu0 0.0
      %822 = vmatpush2.msra.mxu0 0.0
      %823 = vmatprep.subr.mxu0 0.0
      %824 = vmatpush2.msra.mxu0 0.0
      %825 = vmatprep.subr.mxu0 0.0
      %826 = vmatpush2.msra.mxu0 0.0
      %827 = vmatprep.mubr.f32.mxu0 0.0
      %828 = vmatmul.mubr.f32.gmra.mxu0 %v736
      %v829 = vpop.f32.mrf.mxu0
      %v830 = vadd.f32 %v732, %v829
      %v831 = vpop.f32.mrf.mxu0
      %832 = vmatprep.mubr.f32.mxu0 0.0
      %833 = vmatmul.mubr.f32.gmra.mxu0 %v739
      %v834 = vpop.f32.mrf.mxu0
      %v835 = vadd.f32 %v732, %v834
      %v836 = vpop.f32.mrf.mxu0
      %837 = vmatprep.mubr.f32.mxu0 0.0
      %838 = vmatmul.mubr.f32.gmra.mxu0 %v742
      %v839 = vpop.f32.mrf.mxu0
      %v840 = vadd.f32 %v732, %v839
      %v841 = vpop.f32.mrf.mxu0
      %842 = vmatprep.mubr.f32.mxu0 0.0
      %843 = vmatmul.mubr.f32.gmra.mxu0 %v745
      %v844 = vpop.f32.mrf.mxu0
      %v845 = vadd.f32 %v732, %v844
      %v846 = vpop.f32.mrf.mxu0
      %847 = vmatprep.mubr.f32.mxu0 0.0
      %848 = vmatmul.mubr.f32.gmra.mxu0 %v748
      %v849 = vpop.f32.mrf.mxu0
      %v850 = vadd.f32 %v732, %v849
      %v851 = vpop.f32.mrf.mxu0
      %852 = vmatprep.mubr.f32.mxu0 0.0
      %853 = vmatmul.mubr.f32.gmra.mxu0 %v751
      %v854 = vpop.f32.mrf.mxu0
      %v855 = vadd.f32 %v732, %v854
      %v856 = vpop.f32.mrf.mxu0
      %857 = vmatprep.mubr.f32.mxu0 0.0
      %858 = vmatmul.mubr.f32.gmra.mxu0 %v754
      %v859 = vpop.f32.mrf.mxu0
      %v860 = vadd.f32 %v732, %v859
      %v861 = vpop.f32.mrf.mxu0
      %862 = vmatprep.mubr.f32.mxu0 0.0
      %863 = vmatmul.mubr.f32.gmra.mxu0 %v757
      %v864 = vpop.f32.mrf.mxu0
      %v865 = vadd.f32 %v732, %v864
      %v866 = vpop.f32.mrf.mxu0
      %867 = vdwg.mxu0
      %v868 = vld [vmem:[%s5] sm:$0x1]
      %v870 = vsel %vm734, %v688, 0
      %v873 = vsel %vm734, %v693, 0
      %v876 = vsel %vm734, %v698, 0
      %v879 = vsel %vm734, %v703, 0
      %v882 = vsel %vm734, %v708, 0
      %v885 = vsel %vm734, %v713, 0
      %v888 = vsel %vm734, %v718, 0
      %v891 = vsel %vm734, %v723, 0
      %v894 = vsel %vm759, %v868, 0
      %896 = vmatprep.subr.mxu0 0.0
      %897 = vmatpush1.msra.mxu0 0.0
      %898 = vmatprep.subr.mxu0 0.0
      %899 = vmatpush1.msra.mxu0 0.0
      %900 = vmatprep.subr.mxu0 0.0
      %901 = vmatpush1.msra.mxu0 0.0
      %902 = vmatprep.subr.mxu0 0.0
      %903 = vmatpush1.msra.mxu0 0.0
      %904 = vmatprep.subr.mxu0 0.0
      %905 = vmatpush1.msra.mxu0 0.0
      %906 = vmatprep.subr.mxu0 0.0
      %907 = vmatpush1.msra.mxu0 0.0
      %908 = vmatprep.subr.mxu0 0.0
      %909 = vmatpush1.msra.mxu0 0.0
      %910 = vmatprep.subr.mxu0 0.0
      %911 = vmatpush1.msra.mxu0 0.0
      %912 = vmatprep.subr.mxu0 0.0
      %913 = vmatpush1.msra.mxu0 0.0
      %914 = vmatprep.subr.mxu0 0.0
      %915 = vmatpush1.msra.mxu0 0.0
      %916 = vmatprep.subr.mxu0 0.0
      %917 = vmatpush1.msra.mxu0 0.0
      %918 = vmatprep.subr.mxu0 0.0
      %919 = vmatpush1.msra.mxu0 0.0
      %920 = vmatprep.subr.mxu0 0.0
      %921 = vmatpush1.msra.mxu0 0.0
      %922 = vmatprep.subr.mxu0 0.0
      %923 = vmatpush1.msra.mxu0 0.0
      %924 = vmatprep.subr.mxu0 0.0
      %925 = vmatpush1.msra.mxu0 0.0
      %926 = vmatprep.subr.mxu0 0.0
      %927 = vmatpush1.msra.mxu0 %v894
      %928 = vmatprep.subr.mxu0 0.0
      %929 = vmatpush2.msra.mxu0 0.0
      %930 = vmatprep.subr.mxu0 0.0
      %931 = vmatpush2.msra.mxu0 0.0
      %932 = vmatprep.subr.mxu0 0.0
      %933 = vmatpush2.msra.mxu0 0.0
      %934 = vmatprep.subr.mxu0 0.0
      %935 = vmatpush2.msra.mxu0 0.0
      %936 = vmatprep.subr.mxu0 0.0
      %937 = vmatpush2.msra.mxu0 0.0
      %938 = vmatprep.subr.mxu0 0.0
      %939 = vmatpush2.msra.mxu0 0.0
      %940 = vmatprep.subr.mxu0 0.0
      %941 = vmatpush2.msra.mxu0 0.0
      %942 = vmatprep.subr.mxu0 0.0
      %943 = vmatpush2.msra.mxu0 0.0
      %944 = vmatprep.subr.mxu0 0.0
      %945 = vmatpush2.msra.mxu0 0.0
      %946 = vmatprep.subr.mxu0 0.0
      %947 = vmatpush2.msra.mxu0 0.0
      %948 = vmatprep.subr.mxu0 0.0
      %949 = vmatpush2.msra.mxu0 0.0
      %950 = vmatprep.subr.mxu0 0.0
      %951 = vmatpush2.msra.mxu0 0.0
      %952 = vmatprep.subr.mxu0 0.0
      %953 = vmatpush2.msra.mxu0 0.0
      %954 = vmatprep.subr.mxu0 0.0
      %955 = vmatpush2.msra.mxu0 0.0
      %956 = vmatprep.subr.mxu0 0.0
      %957 = vmatpush2.msra.mxu0 0.0
      %958 = vmatprep.subr.mxu0 0.0
      %959 = vmatpush2.msra.mxu0 0.0
      %960 = vmatprep.mubr.f32.mxu0 0.0
      %961 = vmatmul.mubr.f32.gmra.mxu0 %v870
      %v962 = vpop.f32.mrf.mxu0
      %v963 = vadd.f32 0.0, %v962
      %v964 = vpop.f32.mrf.mxu0
      %965 = vmatprep.mubr.f32.mxu0 0.0
      %966 = vmatmul.mubr.f32.gmra.mxu0 %v873
      %v967 = vpop.f32.mrf.mxu0
      %v968 = vadd.f32 0.0, %v967
      %v969 = vpop.f32.mrf.mxu0
      %970 = vmatprep.mubr.f32.mxu0 0.0
      %971 = vmatmul.mubr.f32.gmra.mxu0 %v876
      %v972 = vpop.f32.mrf.mxu0
      %v973 = vadd.f32 0.0, %v972
      %v974 = vpop.f32.mrf.mxu0
      %975 = vmatprep.mubr.f32.mxu0 0.0
      %976 = vmatmul.mubr.f32.gmra.mxu0 %v879
      %v977 = vpop.f32.mrf.mxu0
      %v978 = vadd.f32 0.0, %v977
      %v979 = vpop.f32.mrf.mxu0
      %980 = vmatprep.mubr.f32.mxu0 0.0
      %981 = vmatmul.mubr.f32.gmra.mxu0 %v882
      %v982 = vpop.f32.mrf.mxu0
      %v983 = vadd.f32 0.0, %v982
      %v984 = vpop.f32.mrf.mxu0
      %985 = vmatprep.mubr.f32.mxu0 0.0
      %986 = vmatmul.mubr.f32.gmra.mxu0 %v885
      %v987 = vpop.f32.mrf.mxu0
      %v988 = vadd.f32 0.0, %v987
      %v989 = vpop.f32.mrf.mxu0
      %990 = vmatprep.mubr.f32.mxu0 0.0
      %991 = vmatmul.mubr.f32.gmra.mxu0 %v888
      %v992 = vpop.f32.mrf.mxu0
      %v993 = vadd.f32 0.0, %v992
      %v994 = vpop.f32.mrf.mxu0
      %995 = vmatprep.mubr.f32.mxu0 0.0
      %996 = vmatmul.mubr.f32.gmra.mxu0 %v891
      %v997 = vpop.f32.mrf.mxu0
      %v998 = vadd.f32 0.0, %v997
      %v999 = vpop.f32.mrf.mxu0
      %1000 = vdwg.mxu0
      %v1001 = vld [vmem:[%s440] sm:$0x1]
      %v1003 = vlaneseq
      %v1004 = vshrl.u32 %v1003, 7
      %v1005 = vsub.s32 0, %v1004
      %v1006 = vrot.slane %v1001, %v1005
      %v1008 = vmul.f32 %v830, %v1006
      %v1009 = vmul.f32 %v835, %v1006
      %v1010 = vmul.f32 %v840, %v1006
      %v1011 = vmul.f32 %v845, %v1006
      %v1012 = vmul.f32 %v850, %v1006
      %v1013 = vmul.f32 %v855, %v1006
      %v1014 = vmul.f32 %v860, %v1006
      %v1015 = vmul.f32 %v865, %v1006
      %v1016 = vld [vmem:[%s443] sm:$0x1]
      %v1018 = vlaneseq
      %v1019 = vshrl.u32 %v1018, 7
      %v1020 = vsub.s32 0, %v1019
      %v1021 = vrot.slane %v1016, %v1020
      %v1023 = vmul.f32 %v963, %v1021
      %v1024 = vmul.f32 %v968, %v1021
      %v1025 = vmul.f32 %v973, %v1021
      %v1026 = vmul.f32 %v978, %v1021
      %v1027 = vmul.f32 %v983, %v1021
      %v1028 = vmul.f32 %v988, %v1021
      %v1029 = vmul.f32 %v993, %v1021
      %v1030 = vmul.f32 %v998, %v1021
      %1031 = vst.msk [vmem:[%s452] sm:$0xff] %vm483, %v1008
      %1032 = vst.msk [vmem:[%s452 + $0x8] sm:$0xff] %vm483, %v1009
      %1033 = vst.msk [vmem:[%s452 + $0x10] sm:$0xff] %vm483, %v1010
      %1034 = vst.msk [vmem:[%s452 + $0x18] sm:$0xff] %vm483, %v1011
      %1035 = vst.msk [vmem:[%s452 + $0x20] sm:$0xff] %vm483, %v1012
      %1036 = vst.msk [vmem:[%s452 + $0x28] sm:$0xff] %vm483, %v1013
      %1037 = vst.msk [vmem:[%s452 + $0x30] sm:$0xff] %vm483, %v1014
      %1038 = vst.msk [vmem:[%s452 + $0x38] sm:$0xff] %vm483, %v1015
      %1039 = vst.msk [vmem:[%s462] sm:$0xff] %vm483, %v1023
      %1040 = vst.msk [vmem:[%s462 + $0x8] sm:$0xff] %vm483, %v1024
      %1041 = vst.msk [vmem:[%s462 + $0x10] sm:$0xff] %vm483, %v1025
      %1042 = vst.msk [vmem:[%s462 + $0x18] sm:$0xff] %vm483, %v1026
      %1043 = vst.msk [vmem:[%s462 + $0x20] sm:$0xff] %vm483, %v1027
      %1044 = vst.msk [vmem:[%s462 + $0x28] sm:$0xff] %vm483, %v1028
      %1045 = vst.msk [vmem:[%s462 + $0x30] sm:$0xff] %vm483, %v1029
      %1046 = vst.msk [vmem:[%s462 + $0x38] sm:$0xff] %vm483, %v1030
      %v1047 = vadd.f32 %v1008, %v1023
      %v1048 = vadd.f32 %v1009, %v1024
      %v1049 = vadd.f32 %v1010, %v1025
      %v1050 = vadd.f32 %v1011, %v1026
      %v1051 = vadd.f32 %v1012, %v1027
      %v1052 = vadd.f32 %v1013, %v1028
      %v1053 = vadd.f32 %v1014, %v1029
      %v1054 = vadd.f32 %v1015, %v1030
      %1055 = vst.msk [vmem:[%s472] sm:$0xff] %vm483, %v1047
      %1056 = vst.msk [vmem:[%s472 + $0x8] sm:$0xff] %vm483, %v1048
      %1057 = vst.msk [vmem:[%s472 + $0x10] sm:$0xff] %vm483, %v1049
      %1058 = vst.msk [vmem:[%s472 + $0x18] sm:$0xff] %vm483, %v1050
      %1059 = vst.msk [vmem:[%s472 + $0x20] sm:$0xff] %vm483, %v1051
      %1060 = vst.msk [vmem:[%s472 + $0x28] sm:$0xff] %vm483, %v1052
      %1061 = vst.msk [vmem:[%s472 + $0x30] sm:$0xff] %vm483, %v1053
      %1062 = vst.msk [vmem:[%s472 + $0x38] sm:$0xff] %vm483, %v1054
      %s1063 = smul.u32 8, %s27
      %p1064 = scmp.lt.s32.totalorder %s26, 1
      %s1065 = scalar_select %p1064, %s26, 1
      %p1066 = scmp.lt.s32.totalorder %s1063, 31
      %s1067 = scalar_select %p1066, %s1063, 31
      %s1068 = smul.addr %s1065, 32
      %s1069 = sadd.s32 %s1067, %s1068
      %s1070 = smul.addr %s1069, 8
      %s1071 = scalar_lea.vmem %s8, %s1070
      %s1072 = smul.u32 8, %s27
      %p1073 = scmp.lt.s32.totalorder %s26, 1
      %s1074 = scalar_select %p1073, %s26, 1
      %p1075 = scmp.lt.s32.totalorder %s1072, 31
      %s1076 = scalar_select %p1075, %s1072, 31
      %s1077 = smul.addr %s1074, 32
      %s1078 = sadd.s32 %s1076, %s1077
      %s1079 = smul.addr %s1078, 8
      %s1080 = scalar_lea.vmem %s9, %s1079
      %s1081 = smul.u32 8, %s27
      %p1082 = scmp.lt.s32.totalorder %s26, 1
      %s1083 = scalar_select %p1082, %s26, 1
      %p1084 = scmp.lt.s32.totalorder %s1081, 31
      %s1085 = scalar_select %p1084, %s1081, 31
      %s1086 = smul.addr %s1083, 32
      %s1087 = sadd.s32 %s1085, %s1086
      %s1088 = smul.addr %s1087, 8
      %s1089 = scalar_lea.vmem %s10, %s1088
      // Predicated region
      $region53: #{tpu_custom_call.1} parent=51 // pred_check
        %p1090 = pneg %p239
      $region54: #{tpu_custom_call.1} parent=51 // pred_check_branch
        %1092 = sbr.rel (%p1090) target = $region56
      $region55: #{tpu_custom_call.1} parent=51 // pred_region
        %s1093 = smul.u32 8, %s27
      $region56: #{tpu_custom_call.1} parent=51 // pred_fallthru
        _
      // Predicated region
      $region57: #{tpu_custom_call.1} parent=51 // pred_check
        %p1094 = pneg %p267
      $region58: #{tpu_custom_call.1} parent=51 // pred_check_branch
        %1096 = sbr.rel (%p1094) target = $region60
      $region59: #{tpu_custom_call.1} parent=51 // pred_region
        %s1097 = smul.u32 8, %s27
      $region60: #{tpu_custom_call.1} parent=51 // pred_fallthru
        _
      // Predicated region
      $region61: #{tpu_custom_call.1} parent=51 // pred_check
        %p1098 = pneg %p295
      $region62: #{tpu_custom_call.1} parent=51 // pred_check_branch
        %1100 = sbr.rel (%p1098) target = $region64
      $region63: #{tpu_custom_call.1} parent=51 // pred_region
        %s1101 = smul.u32 8, %s27
      $region64: #{tpu_custom_call.1} parent=51 // pred_fallthru
        _
    $region52: #{tpu_custom_call.1} parent=5 // pred_fallthru
      _
    %p1102 = scmp.le.s32.totalorder 2, %s17
    // Predicated region
    $region65: #{tpu_custom_call.1} parent=5 // pred_check
      %p1103 = pneg %p1102
    $region66: #{tpu_custom_call.1} parent=5 // pred_check_branch
      %1105 = sbr.rel (%p1103) target = $region68
    $region67: #{tpu_custom_call.1} parent=5 // pred_region
      %s1106 = ssub.s32 %s17, 2
      // Predicated region
      $region69: #{tpu_custom_call.1} parent=67 // pred_check
        %p1107 = pneg %p245
      $region70: #{tpu_custom_call.1} parent=67 // pred_check_branch
        %1109 = sbr.rel (%p1107) target = $region72
      $region71: #{tpu_custom_call.1} parent=67 // pred_region
        %s1110 = smul.u32 8, %s29
        %p1111 = scmp.lt.s32.totalorder %s28, 1
        %s1112 = scalar_select %p1111, %s28, 1
        %p1113 = scmp.lt.s32.totalorder %s1110, 31
        %s1114 = scalar_select %p1113, %s1110, 31
        %s1115 = smul.addr %s1112, 32
        %s1116 = sadd.s32 %s1114, %s1115
        %s1117 = smul.addr %s1116, 8
        %s1118 = scalar_lea.vmem %s8, %s1117
      $region72: #{tpu_custom_call.1} parent=67 // pred_fallthru
        _
      // Predicated region
      $region73: #{tpu_custom_call.1} parent=67 // pred_check
        %p1119 = pneg %p273
      $region74: #{tpu_custom_call.1} parent=67 // pred_check_branch
        %1121 = sbr.rel (%p1119) target = $region76
      $region75: #{tpu_custom_call.1} parent=67 // pred_region
        %s1122 = smul.u32 8, %s29
        %p1123 = scmp.lt.s32.totalorder %s28, 1
        %s1124 = scalar_select %p1123, %s28, 1
        %p1125 = scmp.lt.s32.totalorder %s1122, 31
        %s1126 = scalar_select %p1125, %s1122, 31
        %s1127 = smul.addr %s1124, 32
        %s1128 = sadd.s32 %s1126, %s1127
        %s1129 = smul.addr %s1128, 8
        %s1130 = scalar_lea.vmem %s9, %s1129
      $region76: #{tpu_custom_call.1} parent=67 // pred_fallthru
        _
      // Predicated region
      $region77: #{tpu_custom_call.1} parent=67 // pred_check
        %p1131 = pneg %p301
      $region78: #{tpu_custom_call.1} parent=67 // pred_check_branch
        %1133 = sbr.rel (%p1131) target = $region80
      $region79: #{tpu_custom_call.1} parent=67 // pred_region
        %s1134 = smul.u32 8, %s29
        %p1135 = scmp.lt.s32.totalorder %s28, 1
        %s1136 = scalar_select %p1135, %s28, 1
        %p1137 = scmp.lt.s32.totalorder %s1134, 31
        %s1138 = scalar_select %p1137, %s1134, 31
        %s1139 = smul.addr %s1136, 32
        %s1140 = sadd.s32 %s1138, %s1139
        %s1141 = smul.addr %s1140, 8
        %s1142 = scalar_lea.vmem %s10, %s1141
      $region80: #{tpu_custom_call.1} parent=67 // pred_fallthru
        _
    $region68: #{tpu_custom_call.1} parent=5 // pred_fallthru
      _
  $region6: #{tpu_custom_call.1} parent=0 // loop_footer
    %s21 = sadd.s32 1, %s17
  $region7: #{tpu_custom_call.1} parent=0 // loop_footer_branch
    %16 = sbr.rel target = $region3
  $region8: #{tpu_custom_call.1} parent=0 // loop_exit
    _

</llo_original>
